<compile_context>
chip_gen: v7x
topology: tpu7x:2x2x1
jax: 0.10.0
libtpu: 0.0.40
codegen_flags: <defaults>
</compile_context>

<pallas_src>
import math

import jax
import jax.numpy as jnp
from jax.experimental import pallas as pl
from jax.experimental.pallas import tpu as pltpu

_LANE = 128
_SUBLANE = 16  # bf16 sublane packing


def _round_up(a: int, b: int) -> int:
    return (a + b - 1) // b * b


def _nbytes(shape, dtype) -> int:
    return int(math.prod(shape)) * jnp.dtype(dtype).itemsize


def _gelu_tanh(x):
    # GELU(approximate='tanh'): 0.5*x*(1 + tanh(sqrt(2/pi)*(x + 0.044715*x^3)))
    c = 0.7978845608028654  # sqrt(2/pi)
    return 0.5 * x * (1.0 + jnp.tanh(c * (x + 0.044715 * x * x * x)))


def mlp_kernel(x_ref, w1_ref, b1_ref, w2_ref, b2_ref, o_ref):
    x = x_ref[...]                                             # [tm, Cp] bf16
    # fc1: bf16 operands, f32 accumulate on the MXU.
    h = jnp.dot(x, w1_ref[...], preferred_element_type=jnp.float32)
    h = h + b1_ref[...]                                        # [tm, Hp] f32
    g = _gelu_tanh(h)                                          # f32 (EUP tanh)
    # fc2: cast activations back to the MXU-native dtype, f32 accumulate.
    y = jnp.dot(g.astype(w2_ref.dtype), w2_ref[...],
                preferred_element_type=jnp.float32)
    y = y + b2_ref[...]                                        # [tm, Cp] f32
    o_ref[...] = y.astype(o_ref.dtype)


def mlp_pallas(x, w1_t, b1, w2_t, b2, *, tm=512,
               compute_dtype=jnp.bfloat16,
               vmem_budget_bytes=40 * 1024 * 1024,
               vmem_limit_bytes=None):
    """x: [B, T, C]; w1_t: [C, H]; b1: [H]; w2_t: [H, C]; b2: [C]."""
    B, T, C = x.shape
    H = w1_t.shape[1]
    M = B * T
    out_dtype = x.dtype

    # ---- TPU-friendly padded shapes -------------------------------------
    Cp = _round_up(C, _LANE)
    Hp = _round_up(H, _LANE)
    n_rows = _round_up(M, _SUBLANE)

    cbytes = jnp.dtype(compute_dtype).itemsize
    obytes = jnp.dtype(out_dtype).itemsize

    # Resident (per-grid-constant) VMEM: both weights + biases; assume the
    # pipeline may still double-buffer them.
    fixed_bytes = 2 * (_nbytes((Cp, Hp), compute_dtype)
                       + _nbytes((Hp, Cp), compute_dtype)
                       + _nbytes((1, Hp), jnp.float32)
                       + _nbytes((1, Cp), jnp.float32))
    # Per-row bytes: double-buffered x tile + out tile, plus in-flight f32
    # hidden, f32 out and bf16 hidden (cast of g) intermediates.
    per_row_bytes = 2 * (Cp * cbytes + Cp * obytes) + Hp * 4 + Cp * 4 + Hp * cbytes
    # TODO(synk): if fixed_bytes alone exceeds the VMEM budget (very large C),
    # the weights themselves need tiling over H; not needed at these sizes.

    # Largest row tile that fits the budget, clamped to request and rows.
    if vmem_budget_bytes > fixed_bytes:
        tm_fit = (vmem_budget_bytes - fixed_bytes) // max(per_row_bytes, 1)
        tm_fit = max(_SUBLANE, (tm_fit // _SUBLANE) * _SUBLANE)
    else:
        tm_fit = _SUBLANE
    tm = max(_SUBLANE, (min(tm, n_rows, tm_fit) // _SUBLANE) * _SUBLANE)
    # v7x has 2 TensorCores; prefer >= 2 grid steps when there is enough work.
    if n_rows // tm < 2 and n_rows >= 2 * _SUBLANE:
        tm = _round_up(max(n_rows // 2, _SUBLANE), _SUBLANE)
    Mp = _round_up(M, tm)

    x2d = jnp.pad(x.reshape(M, C).astype(compute_dtype),
                  ((0, Mp - M), (0, Cp - C)))
    w1p = jnp.pad(w1_t.astype(compute_dtype), ((0, Cp - C), (0, Hp - H)))
    w2p = jnp.pad(w2_t.astype(compute_dtype), ((0, Hp - H), (0, Cp - C)))
    b1p = jnp.pad(b1.astype(jnp.float32), (0, Hp - H)).reshape(1, Hp)
    b2p = jnp.pad(b2.astype(jnp.float32), (0, Cp - C)).reshape(1, Cp)

    grid = (Mp // tm,)

    # ---- VMEM estimate / scoped limit -------------------------------------
    est = fixed_bytes + tm * per_row_bytes
    if vmem_limit_bytes is None and est > 30 * 1024 * 1024:
        # Stay below v7x physical VMEM (64 MiB); budget keeps us well under.
        vmem_limit_bytes = min(int(est * 5 // 4), 60 * 1024 * 1024)

    compiler_params = pltpu.CompilerParams(
        dimension_semantics=("parallel",),
        vmem_limit_bytes=vmem_limit_bytes,
    )

    cost = pl.CostEstimate(
        flops=2 * Mp * Cp * Hp + 2 * Mp * Hp * Cp,
        transcendentals=Mp * Hp,  # tanh in the GELU
        bytes_accessed=(_nbytes((Mp, Cp), compute_dtype)
                        + _nbytes((Cp, Hp), compute_dtype)
                        + _nbytes((Hp, Cp), compute_dtype)
                        + _nbytes((1, Hp), jnp.float32)
                        + _nbytes((1, Cp), jnp.float32)
                        + _nbytes((Mp, Cp), out_dtype)),
    )

    out2d = pl.pallas_call(
        mlp_kernel,
        out_shape=jax.ShapeDtypeStruct((Mp, Cp), out_dtype),
        grid_spec=pltpu.PrefetchScalarGridSpec(
            num_scalar_prefetch=0,
            grid=grid,
            in_specs=[
                pl.BlockSpec((tm, Cp), lambda i: (i, 0)),   # x row tile
                pl.BlockSpec((Cp, Hp), lambda i: (0, 0)),   # fc1 weight (resident)
                pl.BlockSpec((1, Hp), lambda i: (0, 0)),    # fc1 bias
                pl.BlockSpec((Hp, Cp), lambda i: (0, 0)),   # fc2 weight (resident)
                pl.BlockSpec((1, Cp), lambda i: (0, 0)),    # fc2 bias
            ],
            out_specs=pl.BlockSpec((tm, Cp), lambda i: (i, 0)),
        ),
        compiler_params=compiler_params,
        cost_estimate=cost,
    )(x2d, w1p, b1p, w2p, b2p)

    return out2d[:M, :C].reshape(B, T, C)


def mlp_reference(x, w1_t, b1, w2_t, b2):
    h = jnp.einsum("btc,ch->bth", x, w1_t) + b1
    g = _gelu_tanh(h)
    return jnp.einsum("bth,hc->btc", g, w2_t) + b2


if __name__ == "__main__":
    # Config: n_embed=32 -> hidden=4*32=128. batch=2, seq=8.
    B, T, C = 2, 8, 32
    H = 4 * C

    key = jax.random.PRNGKey(0)
    kx, kw1, kb1, kw2, kb2 = jax.random.split(key, 5)

    x = jax.random.normal(kx, (B, T, C), dtype=jnp.float32)
    # Deterministic init mimicking nn.Linear default scale.
    w1_t = jax.random.normal(kw1, (C, H), dtype=jnp.float32) * (1.0 / jnp.sqrt(C))
    b1 = jax.random.normal(kb1, (H,), dtype=jnp.float32) * 0.01
    w2_t = jax.random.normal(kw2, (H, C), dtype=jnp.float32) * (1.0 / jnp.sqrt(H))
    b2 = jax.random.normal(kb2, (C,), dtype=jnp.float32) * 0.01

    out = mlp_pallas(x, w1_t, b1, w2_t, b2)
    out = jax.block_until_ready(out)

    ref = mlp_reference(x, w1_t, b1, w2_t, b2)
    assert out.shape == (B, T, C)
    # bf16 MXU operands with f32 accumulate: loosened tolerance vs f32 reference.
    assert jnp.allclose(out, ref, atol=5e-2, rtol=5e-2), "mismatch vs reference"
    print("KERNEL_OK")
</pallas_src>

<mosaic_0001>
module attributes {stable_mosaic.version = 11 : i64} {
  func.func @mlp_kernel(%arg0: i32, %arg1: memref<16x128xbf16, #tpu.memory_space<vmem>>, %arg2: memref<128x128xbf16, #tpu.memory_space<vmem>>, %arg3: memref<1x128xf32, #tpu.memory_space<vmem>>, %arg4: memref<128x128xbf16, #tpu.memory_space<vmem>>, %arg5: memref<1x128xf32, #tpu.memory_space<vmem>>, %arg6: memref<16x128xf32, #tpu.memory_space<vmem>>) attributes {dimension_semantics = [#tpu.dimension_semantics<parallel>], iteration_bounds = array<i64: 1>, scalar_prefetch = 0 : i64, scratch_operands = 0 : i64, tpu.core_type = #tpu.core_type<tc>, window_params = [{transform_indices = @transform_0, window_bounds = array<i64: 16, 128>}, {pipeline_mode = #tpu.pipeline_mode<synchronous>, transform_indices = @transform_1, window_bounds = array<i64: 128, 128>}, {pipeline_mode = #tpu.pipeline_mode<synchronous>, transform_indices = @transform_2, window_bounds = array<i64: 1, 128>}, {pipeline_mode = #tpu.pipeline_mode<synchronous>, transform_indices = @transform_3, window_bounds = array<i64: 128, 128>}, {pipeline_mode = #tpu.pipeline_mode<synchronous>, transform_indices = @transform_4, window_bounds = array<i64: 1, 128>}, {transform_indices = @transform_5, window_bounds = array<i64: 16, 128>}]} {
    %c0 = arith.constant 0 : index
    %c0_0 = arith.constant 0 : index
    %0 = vector.load %arg1[%c0, %c0_0] : memref<16x128xbf16, #tpu.memory_space<vmem>>, vector<16x128xbf16>
    %c0_1 = arith.constant 0 : index
    %c0_2 = arith.constant 0 : index
    %1 = vector.load %arg2[%c0_1, %c0_2] : memref<128x128xbf16, #tpu.memory_space<vmem>>, vector<128x128xbf16>
    %cst = arith.constant dense<0.000000e+00> : vector<16x128xf32>
    %2 = tpu.matmul %0, %1, %cst {dimension_numbers = #tpu.dot_dimension_numbers<[1], [0], [0], [1], [0, 0, 1, 1], [], []>} : vector<16x128xbf16>, vector<128x128xbf16>, vector<16x128xf32> -> vector<16x128xf32>
    %c0_3 = arith.constant 0 : index
    %c0_4 = arith.constant 0 : index
    %3 = vector.load %arg3[%c0_3, %c0_4] : memref<1x128xf32, #tpu.memory_space<vmem>>, vector<1x128xf32>
    %4 = vector.broadcast %3 : vector<1x128xf32> to vector<16x128xf32>
    %5 = arith.addf %2, %4 : vector<16x128xf32>
    %cst_5 = arith.constant 5.000000e-01 : f32
    %6 = vector.broadcast %cst_5 : f32 to vector<16x128xf32>
    %7 = arith.mulf %6, %5 : vector<16x128xf32>
    %cst_6 = arith.constant 4.471500e-02 : f32
    %8 = vector.broadcast %cst_6 : f32 to vector<16x128xf32>
    %9 = arith.mulf %8, %5 : vector<16x128xf32>
    %10 = arith.mulf %9, %5 : vector<16x128xf32>
    %11 = arith.mulf %10, %5 : vector<16x128xf32>
    %12 = arith.addf %5, %11 : vector<16x128xf32>
    %cst_7 = arith.constant 0.797884583 : f32
    %13 = vector.broadcast %cst_7 : f32 to vector<16x128xf32>
    %14 = arith.mulf %13, %12 : vector<16x128xf32>
    %15 = math.tanh %14 : vector<16x128xf32>
    %cst_8 = arith.constant 1.000000e+00 : f32
    %16 = vector.broadcast %cst_8 : f32 to vector<16x128xf32>
    %17 = arith.addf %16, %15 : vector<16x128xf32>
    %18 = arith.mulf %7, %17 : vector<16x128xf32>
    %19 = arith.truncf %18 : vector<16x128xf32> to vector<16x128xbf16>
    %c0_9 = arith.constant 0 : index
    %c0_10 = arith.constant 0 : index
    %20 = vector.load %arg4[%c0_9, %c0_10] : memref<128x128xbf16, #tpu.memory_space<vmem>>, vector<128x128xbf16>
    %cst_11 = arith.constant dense<0.000000e+00> : vector<16x128xf32>
    %21 = tpu.matmul %19, %20, %cst_11 {dimension_numbers = #tpu.dot_dimension_numbers<[1], [0], [0], [1], [0, 0, 1, 1], [], []>} : vector<16x128xbf16>, vector<128x128xbf16>, vector<16x128xf32> -> vector<16x128xf32>
    %c0_12 = arith.constant 0 : index
    %c0_13 = arith.constant 0 : index
    %22 = vector.load %arg5[%c0_12, %c0_13] : memref<1x128xf32, #tpu.memory_space<vmem>>, vector<1x128xf32>
    %23 = vector.broadcast %22 : vector<1x128xf32> to vector<16x128xf32>
    %24 = arith.addf %21, %23 : vector<16x128xf32>
    %c0_14 = arith.constant 0 : index
    %c0_15 = arith.constant 0 : index
    %25 = vector.load %arg6[%c0_14, %c0_15] : memref<16x128xf32, #tpu.memory_space<vmem>>, vector<16x128xf32>
    tpu.vector_store %arg6[%c0_14, %c0_15], %24 {strides = array<i32>} : memref<16x128xf32, #tpu.memory_space<vmem>>, vector<16x128xf32>,
    return
  }
  func.func @transform_0(%arg0: i32) -> (i32, i32) {
    %c0_i32 = arith.constant 0 : i32
    %c0_i32_0 = arith.constant 0 : i32
    return %arg0, %c0_i32 : i32, i32
  }
  func.func @transform_1(%arg0: i32) -> (i32, i32) {
    %c0_i32 = arith.constant 0 : i32
    %c0_i32_0 = arith.constant 0 : i32
    %c0_i32_1 = arith.constant 0 : i32
    return %c0_i32, %c0_i32_0 : i32, i32
  }
  func.func @transform_2(%arg0: i32) -> (i32, i32) {
    %c0_i32 = arith.constant 0 : i32
    %c0_i32_0 = arith.constant 0 : i32
    %c0_i32_1 = arith.constant 0 : i32
    return %c0_i32, %c0_i32_0 : i32, i32
  }
  func.func @transform_3(%arg0: i32) -> (i32, i32) {
    %c0_i32 = arith.constant 0 : i32
    %c0_i32_0 = arith.constant 0 : i32
    %c0_i32_1 = arith.constant 0 : i32
    return %c0_i32, %c0_i32_0 : i32, i32
  }
  func.func @transform_4(%arg0: i32) -> (i32, i32) {
    %c0_i32 = arith.constant 0 : i32
    %c0_i32_0 = arith.constant 0 : i32
    %c0_i32_1 = arith.constant 0 : i32
    return %c0_i32, %c0_i32_0 : i32, i32
  }
  func.func @transform_5(%arg0: i32) -> (i32, i32) {
    %c0_i32 = arith.constant 0 : i32
    %c0_i32_0 = arith.constant 0 : i32
    return %arg0, %c0_i32 : i32, i32
  }
}

</mosaic_0001>

<llo_original>
// kernel: tpu_custom_call.1
$region0: #{tpu_custom_call.1}
  #allocation0 [shape = 'u32[]', space=smem, size = 0x4, offset = 0x4, fixed_abs, tag = 'smem constant byte address 0x4 - core index']
  #allocation1 [shape = 'u32[144,128]{1,0:T(1,128)}', space=vmem, size = 0x12000, scoped, tag = 'internal scratch']
  %s0 = inlined_call_operand.hbm [shape: bf16[16,128], index: 0, kind: input, shape index: {}]
  %s1 = inlined_call_operand.hbm [shape: bf16[128,128], index: 1, kind: input, shape index: {}]
  %s2 = inlined_call_operand.vmem [shape: f32[1,128], index: 2, kind: input, shape index: {}]
  %s3 = inlined_call_operand.hbm [shape: bf16[128,128], index: 3, kind: input, shape index: {}]
  %s4 = inlined_call_operand.vmem [shape: f32[1,128], index: 4, kind: input, shape index: {}]
  %s5 = inlined_call_operand.hbm [shape: f32[16,128], index: 5, kind: output, shape index: {}]
  %s6 = sld [smem:[#allocation0]]
  $region42: #{tpu_custom_call.1} parent=0
    _
  %s8 = ssub.s32 1, %s6
  %s9 = scalar_select 0, %s8, %s6
  $region1: #{tpu_custom_call.1} parent=0
    #allocation2 [shape = 'u8[4096]{0}', space=vmem, size = 0x1000, scoped, tag = 'input window, operand 0, single buffered']
    #allocation3 [shape = 's32[1]{0}', space=sflag, size = 0x4, scoped, tag = 'scoped memory for tpu_custom_call.1']
    #allocation4 [shape = 's32[1]{0}', space=sflag, size = 0x4, scoped, tag = 'scoped memory for tpu_custom_call.1']
    #allocation5 [shape = 'u8[32768]{0}', space=vmem, size = 0x8000, scoped, tag = 'input window, operand 1, single buffered']
    #allocation6 [shape = 's32[1]{0}', space=sflag, size = 0x4, scoped, tag = 'scoped memory for tpu_custom_call.1']
    #allocation7 [shape = 'u8[32768]{0}', space=vmem, size = 0x8000, scoped, tag = 'input window, operand 3, single buffered']
    #allocation8 [shape = 'u8[8192]{0}', space=vmem, size = 0x2000, scoped, tag = 'output window, operand 0, single buffered']
    %10 = vsyncpa [#allocation3], 0
    %11 = vsyncpa [#allocation6], 0
    %12 = vsyncpa [#allocation4], 0
    // Predicated region
    $region2: #{tpu_custom_call.1} parent=1 // pred_check
      _
    $region3: #{tpu_custom_call.1} parent=1 // pred_check_branch
      %14 = sbr.rel (0) target = $region5
    $region4: #{tpu_custom_call.1} parent=1 // pred_region
      %s16 = ssub.s32 128, 128
      %17 = vsyncadd [#allocation3], %s16
      %s18 = sshll.u32 [#allocation2], 4
      %s19 = int_to_ptr.vmem [resolvable:$true] %s18
      %24 = dma.hbm_to_vmem [thread:$0]  %s0, 128, %s19, [#allocation3], 64, 64, 4
    $region5: #{tpu_custom_call.1} parent=1 // pred_fallthru
      _
    // Predicated region
    $region6: #{tpu_custom_call.1} parent=1 // pred_check
      _
    $region7: #{tpu_custom_call.1} parent=1 // pred_check_branch
      %26 = sbr.rel (0) target = $region9
    $region8: #{tpu_custom_call.1} parent=1 // pred_region
      %s28 = ssub.s32 1024, 1024
      %29 = vsyncadd [#allocation6], %s28
      %s30 = sshll.u32 [#allocation5], 4
      %s31 = int_to_ptr.vmem [resolvable:$true] %s30
      %36 = dma.hbm_to_vmem [thread:$0]  %s1, 1024, %s31, [#allocation6], 64, 64, 4
    $region9: #{tpu_custom_call.1} parent=1 // pred_fallthru
      _
    // Predicated region
    $region10: #{tpu_custom_call.1} parent=1 // pred_check
      _
    $region11: #{tpu_custom_call.1} parent=1 // pred_check_branch
      %38 = sbr.rel (0) target = $region13
    $region12: #{tpu_custom_call.1} parent=1 // pred_region
      _
    $region13: #{tpu_custom_call.1} parent=1 // pred_fallthru
      _
    // Predicated region
    $region14: #{tpu_custom_call.1} parent=1 // pred_check
      _
    $region15: #{tpu_custom_call.1} parent=1 // pred_check_branch
      %40 = sbr.rel (0) target = $region17
    $region16: #{tpu_custom_call.1} parent=1 // pred_region
      %s42 = ssub.s32 1024, 1024
      %43 = vsyncadd [#allocation6], %s42
      %s44 = sshll.u32 [#allocation7], 4
      %s45 = int_to_ptr.vmem [resolvable:$true] %s44
      %50 = dma.hbm_to_vmem [thread:$0]  %s3, 1024, %s45, [#allocation6], 64, 64, 4
    $region17: #{tpu_custom_call.1} parent=1 // pred_fallthru
      _
    // Predicated region
    $region18: #{tpu_custom_call.1} parent=1 // pred_check
      _
    $region19: #{tpu_custom_call.1} parent=1 // pred_check_branch
      %52 = sbr.rel (0) target = $region21
    $region20: #{tpu_custom_call.1} parent=1 // pred_region
      _
    $region21: #{tpu_custom_call.1} parent=1 // pred_fallthru
      _
    // Predicated region
    $region22: #{tpu_custom_call.1} parent=1 // pred_check
      _
    $region23: #{tpu_custom_call.1} parent=1 // pred_check_branch
      %54 = sbr.rel (0) target = $region25
    $region24: #{tpu_custom_call.1} parent=1 // pred_region
      %55 = dma.done [#allocation3], 128
    $region25: #{tpu_custom_call.1} parent=1 // pred_fallthru
      _
    // Predicated region
    $region26: #{tpu_custom_call.1} parent=1 // pred_check
      _
    $region27: #{tpu_custom_call.1} parent=1 // pred_check_branch
      %57 = sbr.rel (0) target = $region29
    $region28: #{tpu_custom_call.1} parent=1 // pred_region
      %58 = dma.done [#allocation6], 1024
    $region29: #{tpu_custom_call.1} parent=1 // pred_fallthru
      _
    // Predicated region
    $region30: #{tpu_custom_call.1} parent=1 // pred_check
      _
    $region31: #{tpu_custom_call.1} parent=1 // pred_check_branch
      %60 = sbr.rel (0) target = $region33
    $region32: #{tpu_custom_call.1} parent=1 // pred_region
      %61 = dma.done [#allocation6], 1024
    $region33: #{tpu_custom_call.1} parent=1 // pred_fallthru
      _
    %v63 = vld [vmem:[#allocation2] sm:$0xf]
    %v64 = vld [vmem:[#allocation2 + $0x4] sm:$0xf]
    %v65 = vld [vmem:[#allocation5] sm:$0xf]
    %v66 = vld [vmem:[#allocation5 + $0x4] sm:$0xf]
    %v67 = vld [vmem:[#allocation5 + $0x8] sm:$0xf]
    %v68 = vld [vmem:[#allocation5 + $0xc] sm:$0xf]
    %v69 = vld [vmem:[#allocation5 + $0x10] sm:$0xf]
    %v70 = vld [vmem:[#allocation5 + $0x14] sm:$0xf]
    %v71 = vld [vmem:[#allocation5 + $0x18] sm:$0xf]
    %v72 = vld [vmem:[#allocation5 + $0x1c] sm:$0xf]
    %v73 = vld [vmem:[#allocation5 + $0x20] sm:$0xf]
    %v74 = vld [vmem:[#allocation5 + $0x24] sm:$0xf]
    %v75 = vld [vmem:[#allocation5 + $0x28] sm:$0xf]
    %v76 = vld [vmem:[#allocation5 + $0x2c] sm:$0xf]
    %v77 = vld [vmem:[#allocation5 + $0x30] sm:$0xf]
    %v78 = vld [vmem:[#allocation5 + $0x34] sm:$0xf]
    %v79 = vld [vmem:[#allocation5 + $0x38] sm:$0xf]
    %v80 = vld [vmem:[#allocation5 + $0x3c] sm:$0xf]
    %v81 = vld [vmem:[%s2] sm:$0x1]
    %v83 = vlaneseq
    %v84 = vshrl.u32 %v83, 7
    %v85 = vsub.s32 0, %v84
    %v86 = vrot.slane %v81, %v85
    %v90 = vunpack.c.l.b16 %v63
    %v91 = vunpack.c.l.b16 %v64
    %v92 = vpack.c.b16 %v91, %v90
    %v110 = vunpack.c.l.b16 %v65
    %v111 = vunpack.c.l.b16 %v66
    %v112 = vunpack.c.l.b16 %v67
    %v113 = vunpack.c.l.b16 %v68
    %v114 = vunpack.c.l.b16 %v69
    %v115 = vunpack.c.l.b16 %v70
    %v116 = vunpack.c.l.b16 %v71
    %v117 = vunpack.c.l.b16 %v72
    %v118 = vunpack.c.l.b16 %v73
    %v119 = vunpack.c.l.b16 %v74
    %v120 = vunpack.c.l.b16 %v75
    %v121 = vunpack.c.l.b16 %v76
    %v122 = vunpack.c.l.b16 %v77
    %v123 = vunpack.c.l.b16 %v78
    %v124 = vunpack.c.l.b16 %v79
    %v125 = vunpack.c.l.b16 %v80
    %v126 = vpack.c.b16 %v111, %v110
    %v127 = vpack.c.b16 %v113, %v112
    %v128 = vpack.c.b16 %v115, %v114
    %v129 = vpack.c.b16 %v117, %v116
    %v130 = vpack.c.b16 %v119, %v118
    %v131 = vpack.c.b16 %v121, %v120
    %v132 = vpack.c.b16 %v123, %v122
    %v133 = vpack.c.b16 %v125, %v124
    %142 = vmatprep.subr.bf16.mxu0 0
    %143 = vmatpush1.bf16.msra.mxu0 %v126
    %144 = vmatprep.subr.bf16.mxu0 0
    %145 = vmatpush1.bf16.msra.mxu0 %v127
    %146 = vmatprep.subr.bf16.mxu0 0
    %147 = vmatpush1.bf16.msra.mxu0 %v128
    %148 = vmatprep.subr.bf16.mxu0 0
    %149 = vmatpush1.bf16.msra.mxu0 %v129
    %150 = vmatprep.subr.bf16.mxu0 0
    %151 = vmatpush1.bf16.msra.mxu0 %v130
    %152 = vmatprep.subr.bf16.mxu0 0
    %153 = vmatpush1.bf16.msra.mxu0 %v131
    %154 = vmatprep.subr.bf16.mxu0 0
    %155 = vmatpush1.bf16.msra.mxu0 %v132
    %156 = vmatprep.subr.bf16.mxu0 0
    %157 = vmatpush1.bf16.msra.mxu0 %v133
    %158 = vmatprep.subr.bf16.mxu0 0
    %159 = vmatpush1.bf16.msra.mxu0 0
    %160 = vmatprep.subr.bf16.mxu0 0
    %161 = vmatpush1.bf16.msra.mxu0 0
    %162 = vmatprep.subr.bf16.mxu0 0
    %163 = vmatpush1.bf16.msra.mxu0 0
    %164 = vmatprep.subr.bf16.mxu0 0
    %165 = vmatpush1.bf16.msra.mxu0 0
    %166 = vmatprep.subr.bf16.mxu0 0
    %167 = vmatpush1.bf16.msra.mxu0 0
    %168 = vmatprep.subr.bf16.mxu0 0
    %169 = vmatpush1.bf16.msra.mxu0 0
    %170 = vmatprep.subr.bf16.mxu0 0
    %171 = vmatpush1.bf16.msra.mxu0 0
    %172 = vmatprep.subr.bf16.mxu0 0
    %173 = vmatpush1.bf16.msra.mxu0 0
    %174 = vmatprep.mubr.bf16.mxu0 0
    %175 = vmatmul.mubr.bf16.gmra.mrb[0].mxu0 %v92
    %v176 = vpop.f32.mrb[0].mxu0
    %v177 = vadd.f32 %v86, %v176
    %v178 = vpop.f32.mrb[0].mxu0
    %v179 = vpop.f32.mrb[0].mxu0
    %v180 = vadd.f32 %v86, %v179
    %v181 = vpop.f32.mrb[0].mxu0
    %182 = vdwg.mxu0
    %v183 = vmul.f32 %v177, 0.5
    %v184 = vmul.f32 %v180, 0.5
    %v185 = vmul.f32 %v177, 0.044715
    %v186 = vmul.f32 %v180, 0.044715
    %v187 = vmul.f32 %v185, %v177
    %v188 = vmul.f32 %v186, %v180
    %v189 = vmul.f32 %v187, %v177
    %v190 = vmul.f32 %v188, %v180
    %v191 = vadd.f32 %v177, %v189
    %v192 = vadd.f32 %v180, %v190
    %v193 = vmul.f32 %v191, 0.7978846
    %v194 = vmul.f32 %v192, 0.7978846
    %v195 = vtanh.pop %v193
    %v196 = vtanh.pop %v194
    %v197 = vadd.f32 %v195, 1.0
    %v198 = vadd.f32 %v196, 1.0
    %v199 = vmul.f32 %v183, %v197
    %v200 = vmul.f32 %v184, %v198
    %v201 = vpack.c.bf16 %v200, %v199
    %v202 = vld [vmem:[#allocation7] sm:$0xf]
    %v203 = vld [vmem:[#allocation7 + $0x4] sm:$0xf]
    %v204 = vld [vmem:[#allocation7 + $0x8] sm:$0xf]
    %v205 = vld [vmem:[#allocation7 + $0xc] sm:$0xf]
    %v206 = vld [vmem:[#allocation7 + $0x10] sm:$0xf]
    %v207 = vld [vmem:[#allocation7 + $0x14] sm:$0xf]
    %v208 = vld [vmem:[#allocation7 + $0x18] sm:$0xf]
    %v209 = vld [vmem:[#allocation7 + $0x1c] sm:$0xf]
    %v210 = vld [vmem:[#allocation7 + $0x20] sm:$0xf]
    %v211 = vld [vmem:[#allocation7 + $0x24] sm:$0xf]
    %v212 = vld [vmem:[#allocation7 + $0x28] sm:$0xf]
    %v213 = vld [vmem:[#allocation7 + $0x2c] sm:$0xf]
    %v214 = vld [vmem:[#allocation7 + $0x30] sm:$0xf]
    %v215 = vld [vmem:[#allocation7 + $0x34] sm:$0xf]
    %v216 = vld [vmem:[#allocation7 + $0x38] sm:$0xf]
    %v217 = vld [vmem:[#allocation7 + $0x3c] sm:$0xf]
    %v218 = vld [vmem:[%s4] sm:$0x1]
    %v220 = vlaneseq
    %v221 = vshrl.u32 %v220, 7
    %v222 = vsub.s32 0, %v221
    %v223 = vrot.slane %v218, %v222
    %v241 = vunpack.c.l.b16 %v202
    %v242 = vunpack.c.l.b16 %v203
    %v243 = vunpack.c.l.b16 %v204
    %v244 = vunpack.c.l.b16 %v205
    %v245 = vunpack.c.l.b16 %v206
    %v246 = vunpack.c.l.b16 %v207
    %v247 = vunpack.c.l.b16 %v208
    %v248 = vunpack.c.l.b16 %v209
    %v249 = vunpack.c.l.b16 %v210
    %v250 = vunpack.c.l.b16 %v211
    %v251 = vunpack.c.l.b16 %v212
    %v252 = vunpack.c.l.b16 %v213
    %v253 = vunpack.c.l.b16 %v214
    %v254 = vunpack.c.l.b16 %v215
    %v255 = vunpack.c.l.b16 %v216
    %v256 = vunpack.c.l.b16 %v217
    %v257 = vpack.c.b16 %v242, %v241
    %v258 = vpack.c.b16 %v244, %v243
    %v259 = vpack.c.b16 %v246, %v245
    %v260 = vpack.c.b16 %v248, %v247
    %v261 = vpack.c.b16 %v250, %v249
    %v262 = vpack.c.b16 %v252, %v251
    %v263 = vpack.c.b16 %v254, %v253
    %v264 = vpack.c.b16 %v256, %v255
    %273 = vmatprep.subr.bf16.mxu0 0
    %274 = vmatpush1.bf16.msra.mxu0 %v257
    %275 = vmatprep.subr.bf16.mxu0 0
    %276 = vmatpush1.bf16.msra.mxu0 %v258
    %277 = vmatprep.subr.bf16.mxu0 0
    %278 = vmatpush1.bf16.msra.mxu0 %v259
    %279 = vmatprep.subr.bf16.mxu0 0
    %280 = vmatpush1.bf16.msra.mxu0 %v260
    %281 = vmatprep.subr.bf16.mxu0 0
    %282 = vmatpush1.bf16.msra.mxu0 %v261
    %283 = vmatprep.subr.bf16.mxu0 0
    %284 = vmatpush1.bf16.msra.mxu0 %v262
    %285 = vmatprep.subr.bf16.mxu0 0
    %286 = vmatpush1.bf16.msra.mxu0 %v263
    %287 = vmatprep.subr.bf16.mxu0 0
    %288 = vmatpush1.bf16.msra.mxu0 %v264
    %289 = vmatprep.subr.bf16.mxu0 0
    %290 = vmatpush1.bf16.msra.mxu0 0
    %291 = vmatprep.subr.bf16.mxu0 0
    %292 = vmatpush1.bf16.msra.mxu0 0
    %293 = vmatprep.subr.bf16.mxu0 0
    %294 = vmatpush1.bf16.msra.mxu0 0
    %295 = vmatprep.subr.bf16.mxu0 0
    %296 = vmatpush1.bf16.msra.mxu0 0
    %297 = vmatprep.subr.bf16.mxu0 0
    %298 = vmatpush1.bf16.msra.mxu0 0
    %299 = vmatprep.subr.bf16.mxu0 0
    %300 = vmatpush1.bf16.msra.mxu0 0
    %301 = vmatprep.subr.bf16.mxu0 0
    %302 = vmatpush1.bf16.msra.mxu0 0
    %303 = vmatprep.subr.bf16.mxu0 0
    %304 = vmatpush1.bf16.msra.mxu0 0
    %305 = vmatprep.mubr.bf16.mxu0 0
    %306 = vmatmul.mubr.bf16.gmra.mrb[0].mxu0 %v201
    %v307 = vpop.f32.mrb[0].mxu0
    %v308 = vadd.f32 %v223, %v307
    %v309 = vpop.f32.mrb[0].mxu0
    %v310 = vpop.f32.mrb[0].mxu0
    %v311 = vadd.f32 %v223, %v310
    %v312 = vpop.f32.mrb[0].mxu0
    %313 = vdwg.mxu0
    %314 = vst [vmem:[#allocation8] sm:$0xff] %v308
    %315 = vst [vmem:[#allocation8 + $0x8] sm:$0xff] %v311
    // Predicated region
    $region34: #{tpu_custom_call.1} parent=1 // pred_check
      _
    $region35: #{tpu_custom_call.1} parent=1 // pred_check_branch
      %317 = sbr.rel (0) target = $region37
    $region36: #{tpu_custom_call.1} parent=1 // pred_region
      %s319 = ssub.s32 256, 256
      %320 = vsyncadd [#allocation4], %s319
      %s321 = sshll.u32 [#allocation8], 4
      %s322 = int_to_ptr.vmem [resolvable:$true] %s321
      %327 = dma.vmem_to_hbm [thread:$0]  %s322, 256, %s5, [#allocation4], 128, 128, 8
    $region37: #{tpu_custom_call.1} parent=1 // pred_fallthru
      _
    // Predicated region
    $region38: #{tpu_custom_call.1} parent=1 // pred_check
      _
    $region39: #{tpu_custom_call.1} parent=1 // pred_check_branch
      %329 = sbr.rel (0) target = $region41
    $region40: #{tpu_custom_call.1} parent=1 // pred_region
      %330 = dma.done [#allocation4], 256
    $region41: #{tpu_custom_call.1} parent=1 // pred_fallthru
      _
    %331 = vsyncpa [#allocation3], 1
    %332 = vsyncpa [#allocation6], 1
    %333 = vsyncpa [#allocation4], 1

</llo_original>
